<compile_context>
chip_gen: v6e
topology: v6e:2x2x1
jax: 0.10.0
libtpu: 0.0.40
codegen_flags: <defaults>
</compile_context>

<pallas_src>
import functools

import jax
import jax.numpy as jnp
from jax import lax
from jax.experimental import pallas as pl
from jax.experimental.pallas import tpu as pltpu


def _cdiv(a, b):
    return -(-a // b)


def _round_up(x, m):
    return _cdiv(x, m) * m


def _mlpconv_kernel(p_ref, w1_ref, b1_ref, w2_ref, b2_ref, w3_ref, b3_ref,
                    o_ref, acc_ref):
    """Grid = (M tiles ["parallel"], K tiles ["arbitrary"]). Accumulate GEMM-1 over
    K in f32 scratch; on the last K step run the fused epilogue (bias+ReLU and the
    two 1x1x1 GEMMs) and store a lane-dense bf16 tile."""
    kk = pl.program_id(1)

    @pl.when(kk == 0)
    def _():
        acc_ref[...] = jnp.zeros_like(acc_ref)

    # Conv3d(k, s) as GEMM over the flattened receptive field (bf16 MXU, f32 acc).
    acc_ref[...] += jnp.dot(p_ref[...], w1_ref[...],
                            preferred_element_type=jnp.float32)

    @pl.when(kk == pl.num_programs(1) - 1)
    def _():
        h = jnp.maximum(acc_ref[...] + b1_ref[...], 0.0)           # f32 bias + ReLU
        h = jnp.dot(h.astype(w2_ref.dtype), w2_ref[...],           # 1x1x1 conv
                    preferred_element_type=jnp.float32)
        h = jnp.maximum(h + b2_ref[...], 0.0)
        h = jnp.dot(h.astype(w3_ref.dtype), w3_ref[...],           # 1x1x1 conv
                    preferred_element_type=jnp.float32)
        h = jnp.maximum(h + b3_ref[...], 0.0)
        o_ref[...] = h.astype(o_ref.dtype)                         # bf16 writeback


def _im2col_3d(x_cl, k, s):
    """x_cl: [B, D, H, W, C] (channels-last, already in compute dtype)
    -> patches [B*Do*Ho*Wo, k^3*C], (Do, Ho, Wo).

    K-column order is (kd, kh, kw, cin); the weight matrix must be flattened the
    same way (see w1_mat below)."""
    B, D, H, W, C = x_cl.shape
    Do = (D - k) // s + 1
    Ho = (H - k) // s + 1
    Wo = (W - k) // s + 1
    cols = []
    for dz in range(k):
        for dy in range(k):
            for dx in range(k):
                cols.append(
                    x_cl[:, dz:dz + s * Do:s, dy:dy + s * Ho:s,
                         dx:dx + s * Wo:s, :])                     # [B,Do,Ho,Wo,C]
    p = jnp.stack(cols, axis=4)                                    # [B,Do,Ho,Wo,k^3,C]
    return p.reshape(B * Do * Ho * Wo, k ** 3 * C), (Do, Ho, Wo)


@functools.partial(
    jax.jit,
    static_argnames=("kernel_size", "stride", "compute_dtype", "out_dtype",
                     "channels_last", "tm_max", "tk_max"))
def mlpconv_forward(x, params, *, kernel_size, stride,
                    compute_dtype=jnp.bfloat16, out_dtype=jnp.bfloat16,
                    channels_last=False, tm_max=512, tk_max=2048):
    """x: [B, C, D, H, W] (NCDHW, like PyTorch).
    Returns [B, out_ch, Do, Ho, Wo] (or [B, Do, Ho, Wo, out_ch] if channels_last)."""
    w1, b1, w2, b2, w3, b3 = params
    B, C, D, H, W = x.shape
    Cout = w1.shape[0]
    k, s = kernel_size, stride

    # ---- host-side prep, all in bf16 (halves im2col / pad HBM traffic) ---------
    x_cl = jnp.transpose(x, (0, 2, 3, 4, 1)).astype(compute_dtype)   # NDHWC bf16
    patches, (Do, Ho, Wo) = _im2col_3d(x_cl, k, s)                    # [M, K] bf16
    M, K = patches.shape

    # ---- balanced, TPU-friendly tiling (no ~2x over-padding) -------------------
    LANE = 128          # lane width: last dims padded to multiples of 128
    SUB = 16            # bf16 packs 16 rows per sublane group (not 8 = f32 rule)
    tm_max = _round_up(tm_max, SUB)
    tk_max = _round_up(tk_max, LANE)

    Coutp = _round_up(Cout, LANE)                                   # lane-dense out

    n_k = max(_cdiv(_round_up(K, LANE), tk_max), 1)
    TK = _round_up(_cdiv(K, n_k), LANE)
    Kp = n_k * TK

    # >=2 M tiles whenever possible so "parallel" shards across v7x's two TCs.
    n_m = max(_cdiv(_round_up(M, SUB), tm_max), 1)
    if n_m == 1 and M >= 2 * SUB:
        n_m = 2
    TM = _round_up(_cdiv(M, n_m), SUB)
    Mp = n_m * TM

    def pad2(a, rows, cols, dtype):
        a = a.astype(dtype)
        return jnp.pad(a, ((0, rows - a.shape[0]), (0, cols - a.shape[1])))

    # bf16 MXU inputs; zero padding keeps the valid region numerically exact.
    patches_p = pad2(patches, Mp, Kp, compute_dtype)
    # Weight flattening matches the patch K order (kd, kh, kw, cin).
    w1_mat = jnp.transpose(w1, (2, 3, 4, 1, 0)).reshape(k ** 3 * C, Cout)
    w1p = pad2(w1_mat, Kp, Coutp, compute_dtype)
    w2p = pad2(w2.reshape(Cout, Cout).T, Coutp, Coutp, compute_dtype)
    w3p = pad2(w3.reshape(Cout, Cout).T, Coutp, Coutp, compute_dtype)
    b1p = pad2(b1.reshape(1, Cout), 1, Coutp, jnp.float32)
    b2p = pad2(b2.reshape(1, Cout), 1, Coutp, jnp.float32)
    b3p = pad2(b3.reshape(1, Cout), 1, Coutp, jnp.float32)

    grid = (n_m, n_k)
    in_b = jnp.dtype(compute_dtype).itemsize
    out_b = jnp.dtype(out_dtype).itemsize
    cost = pl.CostEstimate(
        flops=2 * Mp * Kp * Coutp + 4 * Mp * Coutp * Coutp,
        transcendentals=0,
        bytes_accessed=(Mp * Kp + Kp * Coutp + 2 * Coutp * Coutp) * in_b
        + 3 * Coutp * 4 + Mp * Coutp * out_b,
    )

    # VMEM working set: double-buffered streaming tiles + resident 1x1 weights
    # + f32 accumulator. ~6 MiB at default caps -> safe on v7x's 64 MiB VMEM.
    vmem_bytes = (2 * (TM * TK + TK * Coutp) * in_b
                  + 2 * 2 * Coutp * Coutp * in_b
                  + TM * Coutp * 4
                  + 2 * TM * Coutp * out_b
                  + 6 * Coutp * 4)
    vmem_limit = int(min(48 * 2 ** 20, max(32 * 2 ** 20, 2 * vmem_bytes)))

    resident = lambda shape: pl.BlockSpec(shape, lambda i, kk: (0, 0))
    out_p = pl.pallas_call(
        _mlpconv_kernel,
        out_shape=jax.ShapeDtypeStruct((Mp, Coutp), out_dtype),
        grid_spec=pltpu.PrefetchScalarGridSpec(
            num_scalar_prefetch=0,
            grid=grid,
            in_specs=[
                pl.BlockSpec((TM, TK), lambda i, kk: (i, kk)),      # patches tile
                pl.BlockSpec((TK, Coutp), lambda i, kk: (kk, 0)),   # w1 K-slab
                resident((1, Coutp)),                               # b1
                resident((Coutp, Coutp)),                           # w2
                resident((1, Coutp)),                               # b2
                resident((Coutp, Coutp)),                           # w3
                resident((1, Coutp)),                               # b3
            ],
            out_specs=pl.BlockSpec((TM, Coutp), lambda i, kk: (i, 0)),
            scratch_shapes=[pltpu.VMEM((TM, Coutp), jnp.float32)],
        ),
        compiler_params=pltpu.CompilerParams(
            dimension_semantics=("parallel", "arbitrary"),
            vmem_limit_bytes=vmem_limit),
        cost_estimate=cost,
    )(patches_p, w1p, b1p, w2p, b2p, w3p, b3p)

    out = out_p[:M, :Cout].reshape(B, Do, Ho, Wo, Cout)
    if channels_last:
        return out                              # NDHWC: skips the transpose pass
    return jnp.transpose(out, (0, 4, 1, 2, 3))  # NCDHW (PyTorch module parity)


def init_params(key, in_channels, out_channels, kernel_size):
    """Deterministic init mimicking PyTorch Conv3d default (kaiming-uniform bounds)."""
    ks = jax.random.split(key, 6)

    def conv_init(kw, kb, cout, cin, ksz):
        fan_in = cin * ksz ** 3
        bound = 1.0 / jnp.sqrt(fan_in)
        w = jax.random.uniform(kw, (cout, cin, ksz, ksz, ksz), jnp.float32,
                               -bound, bound)
        b = jax.random.uniform(kb, (cout,), jnp.float32, -bound, bound)
        return w, b

    w1, b1 = conv_init(ks[0], ks[1], out_channels, in_channels, kernel_size)
    w2, b2 = conv_init(ks[2], ks[3], out_channels, out_channels, 1)
    w3, b3 = conv_init(ks[4], ks[5], out_channels, out_channels, 1)
    return (w1, b1, w2, b2, w3, b3)


def reference_forward(x, params, kernel_size, stride):
    """Pure-JAX f32 reference via lax.conv_general_dilated (NCDHW)."""
    w1, b1, w2, b2, w3, b3 = params
    dn = ("NCDHW", "OIDHW", "NCDHW")

    def conv(x, w, b, s):
        y = lax.conv_general_dilated(x, w, (s, s, s), "VALID",
                                     dimension_numbers=dn)
        return y + b.reshape(1, -1, 1, 1, 1)

    h = jnp.maximum(conv(x, w1, b1, stride), 0.0)
    h = jnp.maximum(conv(h, w2, b2, 1), 0.0)
    h = jnp.maximum(conv(h, w3, b3, 1), 0.0)
    return h


if __name__ == "__main__":
    key = jax.random.PRNGKey(0)
    k_x, k_p = jax.random.split(key)

    # Small shapes consistent with the module: [B, C, D, H, W]
    B, Cin, D, H, W = 2, 4, 8, 8, 8
    Cout, KSZ, STRIDE = 32, 3, 2

    x = jax.random.normal(k_x, (B, Cin, D, H, W), dtype=jnp.float32)
    params = init_params(k_p, Cin, Cout, KSZ)

    y = jax.block_until_ready(
        mlpconv_forward(x, params, kernel_size=KSZ, stride=STRIDE))
    y_ref = jax.block_until_ready(reference_forward(x, params, KSZ, STRIDE))

    assert y.shape == y_ref.shape, (y.shape, y_ref.shape)
    # bf16 MXU inputs / bf16 output (f32 accumulation) vs f32 reference.
    y32 = y.astype(jnp.float32)
    err = float(jnp.max(jnp.abs(y32 - y_ref)))
    assert jnp.allclose(y32, y_ref, atol=5e-2, rtol=5e-2), err
    print("KERNEL_OK")
</pallas_src>

<mosaic_0001>
module attributes {stable_mosaic.version = 11 : i64} {
  func.func @_mlpconv_kernel(%arg0: i32, %arg1: i32, %arg2: memref<32x128xbf16, #tpu.memory_space<vmem>>, %arg3: memref<128x128xbf16, #tpu.memory_space<vmem>>, %arg4: memref<1x128xf32, #tpu.memory_space<vmem>>, %arg5: memref<128x128xbf16, #tpu.memory_space<vmem>>, %arg6: memref<1x128xf32, #tpu.memory_space<vmem>>, %arg7: memref<128x128xbf16, #tpu.memory_space<vmem>>, %arg8: memref<1x128xf32, #tpu.memory_space<vmem>>, %arg9: memref<32x128xbf16, #tpu.memory_space<vmem>>, %arg10: memref<32x128xf32, #tpu.memory_space<vmem>>) attributes {dimension_semantics = [#tpu.dimension_semantics<parallel>, #tpu.dimension_semantics<arbitrary>], iteration_bounds = array<i64: 2, 1>, scalar_prefetch = 0 : i64, scratch_operands = 1 : i64, tpu.core_type = #tpu.core_type<tc>, window_params = [{transform_indices = @transform_0, window_bounds = array<i64: 32, 128>}, {transform_indices = @transform_1, window_bounds = array<i64: 128, 128>}, {pipeline_mode = #tpu.pipeline_mode<synchronous>, transform_indices = @transform_2, window_bounds = array<i64: 1, 128>}, {pipeline_mode = #tpu.pipeline_mode<synchronous>, transform_indices = @transform_3, window_bounds = array<i64: 128, 128>}, {pipeline_mode = #tpu.pipeline_mode<synchronous>, transform_indices = @transform_4, window_bounds = array<i64: 1, 128>}, {pipeline_mode = #tpu.pipeline_mode<synchronous>, transform_indices = @transform_5, window_bounds = array<i64: 128, 128>}, {pipeline_mode = #tpu.pipeline_mode<synchronous>, transform_indices = @transform_6, window_bounds = array<i64: 1, 128>}, {transform_indices = @transform_7, window_bounds = array<i64: 32, 128>}]} {
    %c0_i32 = arith.constant 0 : i32
    %0 = arith.cmpi eq, %arg1, %c0_i32 : i32
    %1 = arith.extui %0 : i1 to i32
    %c0_i32_0 = arith.constant 0 : i32
    %2 = arith.cmpi ne, %1, %c0_i32_0 : i32
    scf.if %2 {
      %cst_10 = arith.constant 0.000000e+00 : f32
      %12 = vector.broadcast %cst_10 : f32 to vector<32x128xf32>
      %c0_11 = arith.constant 0 : index
      %c0_12 = arith.constant 0 : index
      %13 = vector.load %arg10[%c0_11, %c0_12] : memref<32x128xf32, #tpu.memory_space<vmem>>, vector<32x128xf32>
      tpu.vector_store %arg10[%c0_11, %c0_12], %12 {strides = array<i32>} : memref<32x128xf32, #tpu.memory_space<vmem>>, vector<32x128xf32>,
    } else {
    }
    %c0 = arith.constant 0 : index
    %c0_1 = arith.constant 0 : index
    %3 = vector.load %arg10[%c0, %c0_1] : memref<32x128xf32, #tpu.memory_space<vmem>>, vector<32x128xf32>
    %c0_2 = arith.constant 0 : index
    %c0_3 = arith.constant 0 : index
    %4 = vector.load %arg2[%c0_2, %c0_3] : memref<32x128xbf16, #tpu.memory_space<vmem>>, vector<32x128xbf16>
    %c0_4 = arith.constant 0 : index
    %c0_5 = arith.constant 0 : index
    %5 = vector.load %arg3[%c0_4, %c0_5] : memref<128x128xbf16, #tpu.memory_space<vmem>>, vector<128x128xbf16>
    %cst = arith.constant dense<0.000000e+00> : vector<32x128xf32>
    %6 = tpu.matmul %4, %5, %cst {dimension_numbers = #tpu.dot_dimension_numbers<[1], [0], [0], [1], [0, 0, 1, 1], [], []>} : vector<32x128xbf16>, vector<128x128xbf16>, vector<32x128xf32> -> vector<32x128xf32>
    %7 = arith.addf %3, %6 : vector<32x128xf32>
    %c0_6 = arith.constant 0 : index
    %c0_7 = arith.constant 0 : index
    %8 = vector.load %arg10[%c0_6, %c0_7] : memref<32x128xf32, #tpu.memory_space<vmem>>, vector<32x128xf32>
    tpu.vector_store %arg10[%c0_6, %c0_7], %7 {strides = array<i32>} : memref<32x128xf32, #tpu.memory_space<vmem>>, vector<32x128xf32>,
    %c0_i32_8 = arith.constant 0 : i32
    %9 = arith.cmpi eq, %arg1, %c0_i32_8 : i32
    %10 = arith.extui %9 : i1 to i32
    %c0_i32_9 = arith.constant 0 : i32
    %11 = arith.cmpi ne, %10, %c0_i32_9 : i32
    scf.if %11 {
      %c0_10 = arith.constant 0 : index
      %c0_11 = arith.constant 0 : index
      %12 = vector.load %arg10[%c0_10, %c0_11] : memref<32x128xf32, #tpu.memory_space<vmem>>, vector<32x128xf32>
      %c0_12 = arith.constant 0 : index
      %c0_13 = arith.constant 0 : index
      %13 = vector.load %arg4[%c0_12, %c0_13] : memref<1x128xf32, #tpu.memory_space<vmem>>, vector<1x128xf32>
      %14 = vector.broadcast %13 : vector<1x128xf32> to vector<32x128xf32>
      %15 = arith.addf %12, %14 : vector<32x128xf32>
      %cst_14 = arith.constant 0.000000e+00 : f32
      %16 = vector.broadcast %cst_14 : f32 to vector<32x128xf32>
      %17 = arith.maximumf %15, %16 : vector<32x128xf32>
      %18 = arith.truncf %17 : vector<32x128xf32> to vector<32x128xbf16>
      %c0_15 = arith.constant 0 : index
      %c0_16 = arith.constant 0 : index
      %19 = vector.load %arg5[%c0_15, %c0_16] : memref<128x128xbf16, #tpu.memory_space<vmem>>, vector<128x128xbf16>
      %cst_17 = arith.constant dense<0.000000e+00> : vector<32x128xf32>
      %20 = tpu.matmul %18, %19, %cst_17 {dimension_numbers = #tpu.dot_dimension_numbers<[1], [0], [0], [1], [0, 0, 1, 1], [], []>} : vector<32x128xbf16>, vector<128x128xbf16>, vector<32x128xf32> -> vector<32x128xf32>
      %c0_18 = arith.constant 0 : index
      %c0_19 = arith.constant 0 : index
      %21 = vector.load %arg6[%c0_18, %c0_19] : memref<1x128xf32, #tpu.memory_space<vmem>>, vector<1x128xf32>
      %22 = vector.broadcast %21 : vector<1x128xf32> to vector<32x128xf32>
      %23 = arith.addf %20, %22 : vector<32x128xf32>
      %cst_20 = arith.constant 0.000000e+00 : f32
      %24 = vector.broadcast %cst_20 : f32 to vector<32x128xf32>
      %25 = arith.maximumf %23, %24 : vector<32x128xf32>
      %26 = arith.truncf %25 : vector<32x128xf32> to vector<32x128xbf16>
      %c0_21 = arith.constant 0 : index
      %c0_22 = arith.constant 0 : index
      %27 = vector.load %arg7[%c0_21, %c0_22] : memref<128x128xbf16, #tpu.memory_space<vmem>>, vector<128x128xbf16>
      %cst_23 = arith.constant dense<0.000000e+00> : vector<32x128xf32>
      %28 = tpu.matmul %26, %27, %cst_23 {dimension_numbers = #tpu.dot_dimension_numbers<[1], [0], [0], [1], [0, 0, 1, 1], [], []>} : vector<32x128xbf16>, vector<128x128xbf16>, vector<32x128xf32> -> vector<32x128xf32>
      %c0_24 = arith.constant 0 : index
      %c0_25 = arith.constant 0 : index
      %29 = vector.load %arg8[%c0_24, %c0_25] : memref<1x128xf32, #tpu.memory_space<vmem>>, vector<1x128xf32>
      %30 = vector.broadcast %29 : vector<1x128xf32> to vector<32x128xf32>
      %31 = arith.addf %28, %30 : vector<32x128xf32>
      %cst_26 = arith.constant 0.000000e+00 : f32
      %32 = vector.broadcast %cst_26 : f32 to vector<32x128xf32>
      %33 = arith.maximumf %31, %32 : vector<32x128xf32>
      %34 = arith.truncf %33 : vector<32x128xf32> to vector<32x128xbf16>
      %c0_27 = arith.constant 0 : index
      %c0_28 = arith.constant 0 : index
      %35 = vector.load %arg9[%c0_27, %c0_28] : memref<32x128xbf16, #tpu.memory_space<vmem>>, vector<32x128xbf16>
      tpu.vector_store %arg9[%c0_27, %c0_28], %34 {strides = array<i32>} : memref<32x128xbf16, #tpu.memory_space<vmem>>, vector<32x128xbf16>,
    } else {
    }
    return
  }
  func.func @transform_0(%arg0: i32, %arg1: i32) -> (i32, i32) {
    %c0_i32 = arith.constant 0 : i32
    return %arg0, %arg1 : i32, i32
  }
  func.func @transform_1(%arg0: i32, %arg1: i32) -> (i32, i32) {
    %c0_i32 = arith.constant 0 : i32
    %c0_i32_0 = arith.constant 0 : i32
    return %arg1, %c0_i32 : i32, i32
  }
  func.func @transform_2(%arg0: i32, %arg1: i32) -> (i32, i32) {
    %c0_i32 = arith.constant 0 : i32
    %c0_i32_0 = arith.constant 0 : i32
    %c0_i32_1 = arith.constant 0 : i32
    return %c0_i32, %c0_i32_0 : i32, i32
  }
  func.func @transform_3(%arg0: i32, %arg1: i32) -> (i32, i32) {
    %c0_i32 = arith.constant 0 : i32
    %c0_i32_0 = arith.constant 0 : i32
    %c0_i32_1 = arith.constant 0 : i32
    return %c0_i32, %c0_i32_0 : i32, i32
  }
  func.func @transform_4(%arg0: i32, %arg1: i32) -> (i32, i32) {
    %c0_i32 = arith.constant 0 : i32
    %c0_i32_0 = arith.constant 0 : i32
    %c0_i32_1 = arith.constant 0 : i32
    return %c0_i32, %c0_i32_0 : i32, i32
  }
  func.func @transform_5(%arg0: i32, %arg1: i32) -> (i32, i32) {
    %c0_i32 = arith.constant 0 : i32
    %c0_i32_0 = arith.constant 0 : i32
    %c0_i32_1 = arith.constant 0 : i32
    return %c0_i32, %c0_i32_0 : i32, i32
  }
  func.func @transform_6(%arg0: i32, %arg1: i32) -> (i32, i32) {
    %c0_i32 = arith.constant 0 : i32
    %c0_i32_0 = arith.constant 0 : i32
    %c0_i32_1 = arith.constant 0 : i32
    return %c0_i32, %c0_i32_0 : i32, i32
  }
  func.func @transform_7(%arg0: i32, %arg1: i32) -> (i32, i32) {
    %c0_i32 = arith.constant 0 : i32
    %c0_i32_0 = arith.constant 0 : i32
    return %arg0, %c0_i32 : i32, i32
  }
}

</mosaic_0001>

<llo_original>
// kernel: mlpconv_forward.1
$region0: #{mlpconv_forward.1}
  #allocation0 [shape = 'u32[]', space=smem, size = 0x4, offset = 0x4, fixed_abs, tag = 'smem constant byte address 0x4 - core index']
  #allocation1 [shape = 'u32[144,128]{1,0:T(1,128)}', space=vmem, size = 0x12000, scoped, tag = 'internal scratch']
  #allocation2 [shape = 'f32[32,128]{1,0:T(8,128)}', space=vmem, size = 0x4000, scoped, tag = 'scratch operand']
  %s0 = inlined_call_operand.vmem [shape: bf16[64,128], index: 0, kind: input, shape index: {}]
  %s1 = inlined_call_operand.vmem [shape: bf16[128,128], index: 1, kind: input, shape index: {}]
  %s2 = inlined_call_operand.vmem [shape: f32[1,128], index: 2, kind: input, shape index: {}]
  %s3 = inlined_call_operand.vmem [shape: bf16[128,128], index: 3, kind: input, shape index: {}]
  %s4 = inlined_call_operand.vmem [shape: f32[1,128], index: 4, kind: input, shape index: {}]
  %s5 = inlined_call_operand.vmem [shape: bf16[128,128], index: 5, kind: input, shape index: {}]
  %s6 = inlined_call_operand.vmem [shape: f32[1,128], index: 6, kind: input, shape index: {}]
  %s7 = inlined_call_operand.vmem [shape: bf16[64,128], index: 7, kind: output, shape index: {}]
  %s8 = sld [smem:[#allocation0]]
  $region69: #{mlpconv_forward.1} parent=0
    _
  %s10 = ssub.s32 1, %s8
  %s11 = scalar_select 0, %s10, %s8
  loop: start=0, step=1, limit=4
  $region2: #{mlpconv_forward.1} parent=0 // loop_pre_header
    _
  $region3: #{mlpconv_forward.1} parent=0 // loop_header
    %s13 = sphi 0, %s17
    %p14 = scmp.ge.s32.totalorder %s13, 4
    %s20 = sphi 0, %s32
    %s21 = sphi 0, %s28
    %s22 = sphi 0, %s20
    %s23 = sphi 0, %s21
    %s24 = sphi 0, %s22
    %s25 = sphi 0, %s23
    %s37 = sphi 0, %s39
    %s40 = sphi 0, %s37
    %s41 = sphi 0, %s40
    %s57 = sphi 0, %s41
    %s63 = sphi 0, %s65
    %s66 = sphi 0, %s63
    %s67 = sphi 0, %s66
    %s83 = sphi 0, %s67
    %s87 = sphi 0, %s87
    %s89 = sphi 0, %s87
    %s90 = sphi 0, %s89
    %s104 = sphi 0, %s90
    %s108 = sphi 0, %s108
    %s110 = sphi 0, %s108
    %s111 = sphi 0, %s110
    %s125 = sphi 0, %s111
    %s129 = sphi 0, %s129
    %s131 = sphi 0, %s129
    %s132 = sphi 0, %s131
    %s146 = sphi 0, %s132
    %s150 = sphi 0, %s150
    %s152 = sphi 0, %s150
    %s153 = sphi 0, %s152
    %s167 = sphi 0, %s153
    %s171 = sphi 0, %s171
    %s173 = sphi 0, %s171
    %s174 = sphi 0, %s173
    %s188 = sphi 0, %s174
    %s194 = sphi 0, %s196
    %s197 = sphi 0, %s194
    %s198 = sphi 0, %s197
    %s214 = sphi 0, %s198
  $region4: #{mlpconv_forward.1} parent=0 // loop_header_branch
    %16 = sbr.rel (%p14) target = $region8
  $region5: #{mlpconv_forward.1} parent=0 // loop_body
    %s18 = ssub.s32 %s13, 1
    %s19 = ssub.s32 %s13, 2
    %s26 = sadd.s32 1, %s21
    %p27 = scmp.ge.s32.totalorder %s26, 1
    %s28 = scalar_select %p27, 0, %s26
    %s29 = sadd.s32 1, %s20
    %s30 = scalar_select %p27, %s29, %s20
    %p31 = scmp.ge.s32.totalorder %s30, 2
    %s32 = scalar_select %p31, 0, %s30
    %s33 = ssub.s32 %s20, %s32
    %s34 = ssub.s32 %s21, %s28
    %s35 = sor.u32 %s33, %s34
    %p36 = scmp.eq.s32.totalorder %s35, 0
    %s38 = sadd.s32 %s37, 1
    %s39 = scalar_select %p36, %s37, %s38
    %p42 = pneg %p36
    %p43 = scmp.eq.s32.totalorder %s13, 1
    %p44 = por %p42, %p43
    %p45 = scmp.ne.s32.totalorder %s37, %s40
    %p46 = scmp.eq.s32.totalorder %s13, 0
    %p47 = por %p45, %p46
    %p48 = scmp.ne.s32.totalorder %s37, %s40
    %p49 = scmp.eq.s32.totalorder %s18, 1
    %p50 = por %p48, %p49
    %p51 = scmp.ne.s32.totalorder %s40, %s41
    %p52 = scmp.eq.s32.totalorder %s18, 0
    %p53 = por %p51, %p52
    %p54 = scmp.ne.s32.totalorder %s40, %s41
    %p55 = scmp.eq.s32.totalorder %s19, 1
    %p56 = por %p54, %p55
    %p58 = scmp.ne.s32.totalorder %s41, %s57
    %p59 = scmp.eq.s32.totalorder %s19, 0
    %p60 = por %p58, %p59
    %s61 = ssub.s32 %s21, %s28
    %p62 = scmp.eq.s32.totalorder %s61, 0
    %s64 = sadd.s32 %s63, 1
    %s65 = scalar_select %p62, %s63, %s64
    %p68 = pneg %p62
    %p69 = scmp.eq.s32.totalorder %s13, 1
    %p70 = por %p68, %p69
    %p71 = scmp.ne.s32.totalorder %s63, %s66
    %p72 = scmp.eq.s32.totalorder %s13, 0
    %p73 = por %p71, %p72
    %p74 = scmp.ne.s32.totalorder %s63, %s66
    %p75 = scmp.eq.s32.totalorder %s18, 1
    %p76 = por %p74, %p75
    %p77 = scmp.ne.s32.totalorder %s66, %s67
    %p78 = scmp.eq.s32.totalorder %s18, 0
    %p79 = por %p77, %p78
    %p80 = scmp.ne.s32.totalorder %s66, %s67
    %p81 = scmp.eq.s32.totalorder %s19, 1
    %p82 = por %p80, %p81
    %p84 = scmp.ne.s32.totalorder %s67, %s83
    %p85 = scmp.eq.s32.totalorder %s19, 0
    %p86 = por %p84, %p85
    %s88 = sadd.s32 %s87, 1
    %p91 = scmp.eq.s32.totalorder %s13, 1
    %p92 = scmp.ne.s32.totalorder %s87, %s89
    %p93 = scmp.eq.s32.totalorder %s13, 0
    %p94 = por %p92, %p93
    %p95 = scmp.ne.s32.totalorder %s87, %s89
    %p96 = scmp.eq.s32.totalorder %s18, 1
    %p97 = por %p95, %p96
    %p98 = scmp.ne.s32.totalorder %s89, %s90
    %p99 = scmp.eq.s32.totalorder %s18, 0
    %p100 = por %p98, %p99
    %p101 = scmp.ne.s32.totalorder %s89, %s90
    %p102 = scmp.eq.s32.totalorder %s19, 1
    %p103 = por %p101, %p102
    %p105 = scmp.ne.s32.totalorder %s90, %s104
    %p106 = scmp.eq.s32.totalorder %s19, 0
    %p107 = por %p105, %p106
    %s109 = sadd.s32 %s108, 1
    %p112 = scmp.eq.s32.totalorder %s13, 1
    %p113 = scmp.ne.s32.totalorder %s108, %s110
    %p114 = scmp.eq.s32.totalorder %s13, 0
    %p115 = por %p113, %p114
    %p116 = scmp.ne.s32.totalorder %s108, %s110
    %p117 = scmp.eq.s32.totalorder %s18, 1
    %p118 = por %p116, %p117
    %p119 = scmp.ne.s32.totalorder %s110, %s111
    %p120 = scmp.eq.s32.totalorder %s18, 0
    %p121 = por %p119, %p120
    %p122 = scmp.ne.s32.totalorder %s110, %s111
    %p123 = scmp.eq.s32.totalorder %s19, 1
    %p124 = por %p122, %p123
    %p126 = scmp.ne.s32.totalorder %s111, %s125
    %p127 = scmp.eq.s32.totalorder %s19, 0
    %p128 = por %p126, %p127
    %s130 = sadd.s32 %s129, 1
    %p133 = scmp.eq.s32.totalorder %s13, 1
    %p134 = scmp.ne.s32.totalorder %s129, %s131
    %p135 = scmp.eq.s32.totalorder %s13, 0
    %p136 = por %p134, %p135
    %p137 = scmp.ne.s32.totalorder %s129, %s131
    %p138 = scmp.eq.s32.totalorder %s18, 1
    %p139 = por %p137, %p138
    %p140 = scmp.ne.s32.totalorder %s131, %s132
    %p141 = scmp.eq.s32.totalorder %s18, 0
    %p142 = por %p140, %p141
    %p143 = scmp.ne.s32.totalorder %s131, %s132
    %p144 = scmp.eq.s32.totalorder %s19, 1
    %p145 = por %p143, %p144
    %p147 = scmp.ne.s32.totalorder %s132, %s146
    %p148 = scmp.eq.s32.totalorder %s19, 0
    %p149 = por %p147, %p148
    %s151 = sadd.s32 %s150, 1
    %p154 = scmp.eq.s32.totalorder %s13, 1
    %p155 = scmp.ne.s32.totalorder %s150, %s152
    %p156 = scmp.eq.s32.totalorder %s13, 0
    %p157 = por %p155, %p156
    %p158 = scmp.ne.s32.totalorder %s150, %s152
    %p159 = scmp.eq.s32.totalorder %s18, 1
    %p160 = por %p158, %p159
    %p161 = scmp.ne.s32.totalorder %s152, %s153
    %p162 = scmp.eq.s32.totalorder %s18, 0
    %p163 = por %p161, %p162
    %p164 = scmp.ne.s32.totalorder %s152, %s153
    %p165 = scmp.eq.s32.totalorder %s19, 1
    %p166 = por %p164, %p165
    %p168 = scmp.ne.s32.totalorder %s153, %s167
    %p169 = scmp.eq.s32.totalorder %s19, 0
    %p170 = por %p168, %p169
    %s172 = sadd.s32 %s171, 1
    %p175 = scmp.eq.s32.totalorder %s13, 1
    %p176 = scmp.ne.s32.totalorder %s171, %s173
    %p177 = scmp.eq.s32.totalorder %s13, 0
    %p178 = por %p176, %p177
    %p179 = scmp.ne.s32.totalorder %s171, %s173
    %p180 = scmp.eq.s32.totalorder %s18, 1
    %p181 = por %p179, %p180
    %p182 = scmp.ne.s32.totalorder %s173, %s174
    %p183 = scmp.eq.s32.totalorder %s18, 0
    %p184 = por %p182, %p183
    %p185 = scmp.ne.s32.totalorder %s173, %s174
    %p186 = scmp.eq.s32.totalorder %s19, 1
    %p187 = por %p185, %p186
    %p189 = scmp.ne.s32.totalorder %s174, %s188
    %p190 = scmp.eq.s32.totalorder %s19, 0
    %p191 = por %p189, %p190
    %s192 = ssub.s32 %s20, %s32
    %p193 = scmp.eq.s32.totalorder %s192, 0
    %s195 = sadd.s32 %s194, 1
    %s196 = scalar_select %p193, %s194, %s195
    %p199 = pneg %p193
    %p200 = scmp.eq.s32.totalorder %s13, 1
    %p201 = por %p199, %p200
    %p202 = scmp.ne.s32.totalorder %s194, %s197
    %p203 = scmp.eq.s32.totalorder %s13, 0
    %p204 = por %p202, %p203
    %p205 = scmp.ne.s32.totalorder %s194, %s197
    %p206 = scmp.eq.s32.totalorder %s18, 1
    %p207 = por %p205, %p206
    %p208 = scmp.ne.s32.totalorder %s197, %s198
    %p209 = scmp.eq.s32.totalorder %s18, 0
    %p210 = por %p208, %p209
    %p211 = scmp.ne.s32.totalorder %s197, %s198
    %p212 = scmp.eq.s32.totalorder %s19, 1
    %p213 = por %p211, %p212
    %p215 = scmp.ne.s32.totalorder %s198, %s214
    %p216 = scmp.eq.s32.totalorder %s19, 0
    %p217 = por %p215, %p216
    %p218 = scmp.le.s32.totalorder 1, %s13
    %p219 = scmp.lt.s32.totalorder %s13, 3
    %p220 = pnand %p218, %p219
    %p221 = pneg %p220
    // Predicated region
    $region9: #{mlpconv_forward.1} parent=5 // pred_check
      _
    $region10: #{mlpconv_forward.1} parent=5 // pred_check_branch
      %223 = sbr.rel (%p220) target = $region12
    $region11: #{mlpconv_forward.1} parent=5 // pred_region
      %s224 = ssub.s32 %s13, 1
      // Predicated region
      $region13: #{mlpconv_forward.1} parent=11 // pred_check
        %p225 = pneg %p79
      $region14: #{mlpconv_forward.1} parent=11 // pred_check_branch
        %227 = sbr.rel (%p225) target = $region16
      $region15: #{mlpconv_forward.1} parent=11 // pred_region
        %s228 = smul.u32 16, %s23
        %p229 = scmp.lt.s32.totalorder %s228, 15
        %s230 = scalar_select %p229, %s228, 15
        %s231 = smul.addr %s230, 4
        %s232 = scalar_lea.vmem %s1, %s231
        %s233 = smul.u32 16, %s23
      $region16: #{mlpconv_forward.1} parent=11 // pred_fallthru
        _
      // Predicated region
      $region17: #{mlpconv_forward.1} parent=11 // pred_check
        %p234 = pneg %p100
      $region18: #{mlpconv_forward.1} parent=11 // pred_check_branch
        %236 = sbr.rel (%p234) target = $region20
      $region19: #{mlpconv_forward.1} parent=11 // pred_region
        _
      $region20: #{mlpconv_forward.1} parent=11 // pred_fallthru
        _
      // Predicated region
      $region21: #{mlpconv_forward.1} parent=11 // pred_check
        %p237 = pneg %p121
      $region22: #{mlpconv_forward.1} parent=11 // pred_check_branch
        %239 = sbr.rel (%p237) target = $region24
      $region23: #{mlpconv_forward.1} parent=11 // pred_region
        _
      $region24: #{mlpconv_forward.1} parent=11 // pred_fallthru
        _
      // Predicated region
      $region25: #{mlpconv_forward.1} parent=11 // pred_check
        %p240 = pneg %p142
      $region26: #{mlpconv_forward.1} parent=11 // pred_check_branch
        %242 = sbr.rel (%p240) target = $region28
      $region27: #{mlpconv_forward.1} parent=11 // pred_region
        _
      $region28: #{mlpconv_forward.1} parent=11 // pred_fallthru
        _
      // Predicated region
      $region29: #{mlpconv_forward.1} parent=11 // pred_check
        %p243 = pneg %p163
      $region30: #{mlpconv_forward.1} parent=11 // pred_check_branch
        %245 = sbr.rel (%p243) target = $region32
      $region31: #{mlpconv_forward.1} parent=11 // pred_region
        _
      $region32: #{mlpconv_forward.1} parent=11 // pred_fallthru
        _
      // Predicated region
      $region33: #{mlpconv_forward.1} parent=11 // pred_check
        %p246 = pneg %p184
      $region34: #{mlpconv_forward.1} parent=11 // pred_check_branch
        %248 = sbr.rel (%p246) target = $region36
      $region35: #{mlpconv_forward.1} parent=11 // pred_region
        _
      $region36: #{mlpconv_forward.1} parent=11 // pred_fallthru
        _
    $region12: #{mlpconv_forward.1} parent=5 // pred_fallthru
      _
    %p249 = scmp.lt.s32.totalorder %s13, 2
    // Predicated region
    $region37: #{mlpconv_forward.1} parent=5 // pred_check
      %p250 = pneg %p249
    $region38: #{mlpconv_forward.1} parent=5 // pred_check_branch
      %252 = sbr.rel (%p250) target = $region40
    $region39: #{mlpconv_forward.1} parent=5 // pred_region
      // Predicated region
      $region41: #{mlpconv_forward.1} parent=39 // pred_check
        %p253 = pneg %p47
      $region42: #{mlpconv_forward.1} parent=39 // pred_check_branch
        %255 = sbr.rel (%p253) target = $region44
      $region43: #{mlpconv_forward.1} parent=39 // pred_region
        %s256 = smul.u32 4, %s20
        %p257 = scmp.lt.s32.totalorder %s256, 7
        %s258 = scalar_select %p257, %s256, 7
        %p259 = scmp.lt.s32.totalorder %s21, 0
        %s260 = scalar_select %p259, %s21, 0
        %s261 = sadd.s32 %s260, %s258
        %s262 = smul.addr %s261, 4
        %s263 = scalar_lea.vmem %s0, %s262
        %s264 = smul.u32 4, %s20
      $region44: #{mlpconv_forward.1} parent=39 // pred_fallthru
        _
    $region40: #{mlpconv_forward.1} parent=5 // pred_fallthru
      _
    %p265 = scmp.le.s32.totalorder 1, %s13
    %p266 = scmp.lt.s32.totalorder %s13, 3
    %p267 = pnand %p265, %p266
    %p268 = pneg %p267
    // Predicated region
    $region45: #{mlpconv_forward.1} parent=5 // pred_check
      _
    $region46: #{mlpconv_forward.1} parent=5 // pred_check_branch
      %270 = sbr.rel (%p267) target = $region48
    $region47: #{mlpconv_forward.1} parent=5 // pred_region
      %s271 = ssub.s32 %s13, 1
      %s272 = smul.u32 4, %s22
      %p273 = scmp.lt.s32.totalorder %s272, 7
      %s274 = scalar_select %p273, %s272, 7
      %p275 = scmp.lt.s32.totalorder %s23, 0
      %s276 = scalar_select %p275, %s23, 0
      %s277 = sadd.s32 %s276, %s274
      %s278 = smul.addr %s277, 4
      %s279 = scalar_lea.vmem %s0, %s278
      %p280 = pneg %p53
      %p281 = pneg %p50
      %s282 = smul.u32 16, %s23
      %p283 = scmp.lt.s32.totalorder %s282, 15
      %s284 = scalar_select %p283, %s282, 15
      %s285 = smul.addr %s284, 4
      %s286 = scalar_lea.vmem %s1, %s285
      %p287 = pneg %p79
      %p288 = pneg %p76
      %p289 = pneg %p100
      %p290 = pneg %p97
      %p291 = pneg %p121
      %p292 = pneg %p118
      %p293 = pneg %p142
      %p294 = pneg %p139
      %p295 = pneg %p163
      %p296 = pneg %p160
      %p297 = pneg %p184
      %p298 = pneg %p181
      %p299 = pneg %p210
      %p300 = pneg %p207
      %s301 = smul.u32 4, %s22
      %p302 = scmp.lt.s32.totalorder %s301, 7
      %s303 = scalar_select %p302, %s301, 7
      %s304 = smul.addr %s303, 4
      %s305 = scalar_lea.vmem %s7, %s304
      %s306 = smul.u32 4, %s22
      %p307 = scmp.lt.s32.totalorder %s306, 7
      %s308 = scalar_select %p307, %s306, 7
      %p309 = scmp.lt.s32.totalorder %s23, 0
      %s310 = scalar_select %p309, %s23, 0
      %s311 = sadd.s32 %s310, %s308
      %s312 = smul.addr %s311, 4
      %s313 = scalar_lea.vmem %s0, %s312
      %s314 = smul.u32 4, %s22
      %s315 = smul.u32 16, %s23
      %p316 = scmp.lt.s32.totalorder %s315, 15
      %s317 = scalar_select %p316, %s315, 15
      %s318 = smul.addr %s317, 4
      %s319 = scalar_lea.vmem %s1, %s318
      %s320 = smul.u32 16, %s23
      %s321 = smul.u32 4, %s22
      %p322 = scmp.lt.s32.totalorder %s321, 7
      %s323 = scalar_select %p322, %s321, 7
      %s324 = smul.addr %s323, 4
      %s325 = scalar_lea.vmem %s7, %s324
      %s326 = smul.u32 4, %s22
      %p328 = scmp.eq.s32.totalorder %s23, 0
      // Predicated region
      $region49: #{mlpconv_forward.1} parent=47 // pred_check
        %p329 = pneg %p328
      $region50: #{mlpconv_forward.1} parent=47 // pred_check_branch
        %331 = sbr.rel (%p329) target = $region52
      $region51: #{mlpconv_forward.1} parent=47 // pred_region
        %332 = vst [vmem:[#allocation2] sm:$0xff] 0.0
        %333 = vst [vmem:[#allocation2 + $0x8] sm:$0xff] 0.0
        %334 = vst [vmem:[#allocation2 + $0x10] sm:$0xff] 0.0
        %335 = vst [vmem:[#allocation2 + $0x18] sm:$0xff] 0.0
      $region52: #{mlpconv_forward.1} parent=47 // pred_fallthru
        _
      %v336 = vld [vmem:[#allocation2] sm:$0xff]
      %v337 = vld [vmem:[#allocation2 + $0x8] sm:$0xff]
      %v338 = vld [vmem:[#allocation2 + $0x10] sm:$0xff]
      %v339 = vld [vmem:[#allocation2 + $0x18] sm:$0xff]
      %v340 = vld [vmem:[%s313] sm:$0xf]
      %v341 = vld [vmem:[%s313 + $0x4] sm:$0xf]
      %v342 = vld [vmem:[%s313 + $0x8] sm:$0xf]
      %v343 = vld [vmem:[%s313 + $0xc] sm:$0xf]
      %v344 = vld [vmem:[%s319] sm:$0xf]
      %v345 = vld [vmem:[%s319 + $0x4] sm:$0xf]
      %v346 = vld [vmem:[%s319 + $0x8] sm:$0xf]
      %v347 = vld [vmem:[%s319 + $0xc] sm:$0xf]
      %v348 = vld [vmem:[%s319 + $0x10] sm:$0xf]
      %v349 = vld [vmem:[%s319 + $0x14] sm:$0xf]
      %v350 = vld [vmem:[%s319 + $0x18] sm:$0xf]
      %v351 = vld [vmem:[%s319 + $0x1c] sm:$0xf]
      %v352 = vld [vmem:[%s319 + $0x20] sm:$0xf]
      %v353 = vld [vmem:[%s319 + $0x24] sm:$0xf]
      %v354 = vld [vmem:[%s319 + $0x28] sm:$0xf]
      %v355 = vld [vmem:[%s319 + $0x2c] sm:$0xf]
      %v356 = vld [vmem:[%s319 + $0x30] sm:$0xf]
      %v357 = vld [vmem:[%s319 + $0x34] sm:$0xf]
      %v358 = vld [vmem:[%s319 + $0x38] sm:$0xf]
      %v359 = vld [vmem:[%s319 + $0x3c] sm:$0xf]
      %v364 = vunpack.c.l.b16 %v340
      %v365 = vunpack.c.l.b16 %v341
      %v366 = vunpack.c.l.b16 %v342
      %v367 = vunpack.c.l.b16 %v343
      %v368 = vpack.c.b16 %v365, %v364
      %v369 = vpack.c.b16 %v367, %v366
      %v388 = vunpack.c.l.b16 %v344
      %v389 = vunpack.c.l.b16 %v345
      %v390 = vunpack.c.l.b16 %v346
      %v391 = vunpack.c.l.b16 %v347
      %v392 = vunpack.c.l.b16 %v348
      %v393 = vunpack.c.l.b16 %v349
      %v394 = vunpack.c.l.b16 %v350
      %v395 = vunpack.c.l.b16 %v351
      %v396 = vunpack.c.l.b16 %v352
      %v397 = vunpack.c.l.b16 %v353
      %v398 = vunpack.c.l.b16 %v354
      %v399 = vunpack.c.l.b16 %v355
      %v400 = vunpack.c.l.b16 %v356
      %v401 = vunpack.c.l.b16 %v357
      %v402 = vunpack.c.l.b16 %v358
      %v403 = vunpack.c.l.b16 %v359
      %v404 = vpack.c.b16 %v389, %v388
      %v405 = vpack.c.b16 %v391, %v390
      %v406 = vpack.c.b16 %v393, %v392
      %v407 = vpack.c.b16 %v395, %v394
      %v408 = vpack.c.b16 %v397, %v396
      %v409 = vpack.c.b16 %v399, %v398
      %v410 = vpack.c.b16 %v401, %v400
      %v411 = vpack.c.b16 %v403, %v402
      %420 = vmatprep.subr.bf16.mxu0 0
      %421 = vmatpush1.bf16.msra.mxu0 %v411
      %422 = vmatprep.subr.bf16.mxu0 0
      %423 = vmatpush1.bf16.msra.mxu0 %v410
      %424 = vmatprep.subr.bf16.mxu0 0
      %425 = vmatpush1.bf16.msra.mxu0 %v409
      %426 = vmatprep.subr.bf16.mxu0 0
      %427 = vmatpush1.bf16.msra.mxu0 %v408
      %428 = vmatprep.subr.bf16.mxu0 0
      %429 = vmatpush1.bf16.msra.mxu0 %v407
      %430 = vmatprep.subr.bf16.mxu0 0
      %431 = vmatpush1.bf16.msra.mxu0 %v406
      %432 = vmatprep.subr.bf16.mxu0 0
      %433 = vmatpush1.bf16.msra.mxu0 %v405
      %434 = vmatprep.subr.bf16.mxu0 0
      %435 = vmatpush1.bf16.msra.mxu0 %v404
      %436 = vmatprep.subr.bf16.mxu0 0
      %437 = vmatpush2.bf16.msra.mxu0 0
      %438 = vmatprep.subr.bf16.mxu0 0
      %439 = vmatpush2.bf16.msra.mxu0 0
      %440 = vmatprep.subr.bf16.mxu0 0
      %441 = vmatpush2.bf16.msra.mxu0 0
      %442 = vmatprep.subr.bf16.mxu0 0
      %443 = vmatpush2.bf16.msra.mxu0 0
      %444 = vmatprep.subr.bf16.mxu0 0
      %445 = vmatpush2.bf16.msra.mxu0 0
      %446 = vmatprep.subr.bf16.mxu0 0
      %447 = vmatpush2.bf16.msra.mxu0 0
      %448 = vmatprep.subr.bf16.mxu0 0
      %449 = vmatpush2.bf16.msra.mxu0 0
      %450 = vmatprep.subr.bf16.mxu0 0
      %451 = vmatpush2.bf16.msra.mxu0 0
      %452 = vmatprep.mubr.bf16.mxu0 0
      %453 = vmatmul.mubr.bf16.gmra.mxu0 %v368
      %v454 = vpop.f32.mrf.mxu0
      %v455 = vadd.f32 0.0, %v454
      %v456 = vpop.f32.mrf.mxu0
      %v457 = vpop.f32.mrf.mxu0
      %v458 = vadd.f32 0.0, %v457
      %v459 = vpop.f32.mrf.mxu0
      %460 = vmatprep.mubr.bf16.mxu0 0
      %461 = vmatmul.mubr.bf16.gmra.mxu0 %v369
      %v462 = vpop.f32.mrf.mxu0
      %v463 = vadd.f32 0.0, %v462
      %v464 = vpop.f32.mrf.mxu0
      %v465 = vpop.f32.mrf.mxu0
      %v466 = vadd.f32 0.0, %v465
      %v467 = vpop.f32.mrf.mxu0
      %468 = vdwg.mxu0
      %v469 = vadd.f32 %v336, %v455
      %v470 = vadd.f32 %v337, %v458
      %v471 = vadd.f32 %v338, %v463
      %v472 = vadd.f32 %v339, %v466
      %473 = vst [vmem:[#allocation2] sm:$0xff] %v469
      %474 = vst [vmem:[#allocation2 + $0x8] sm:$0xff] %v470
      %475 = vst [vmem:[#allocation2 + $0x10] sm:$0xff] %v471
      %476 = vst [vmem:[#allocation2 + $0x18] sm:$0xff] %v472
      // Predicated region
      $region53: #{mlpconv_forward.1} parent=47 // pred_check
        %p477 = pneg %p328
      $region54: #{mlpconv_forward.1} parent=47 // pred_check_branch
        %479 = sbr.rel (%p477) target = $region56
      $region55: #{mlpconv_forward.1} parent=47 // pred_region
        %v480 = vld [vmem:[#allocation2] sm:$0xff]
        %v481 = vld [vmem:[#allocation2 + $0x8] sm:$0xff]
        %v482 = vld [vmem:[#allocation2 + $0x10] sm:$0xff]
        %v483 = vld [vmem:[#allocation2 + $0x18] sm:$0xff]
        %v484 = vld [vmem:[%s2] sm:$0x1]
        %v486 = vlaneseq
        %v487 = vshrl.u32 %v486, 7
        %v488 = vsub.s32 0, %v487
        %v489 = vrot.slane %v484, %v488
        %v491 = vadd.f32 %v480, %v489
        %v492 = vadd.f32 %v481, %v489
        %v493 = vadd.f32 %v482, %v489
        %v494 = vadd.f32 %v483, %v489
        %v495 = vmax.f32 %v491, 0.0
        %v496 = vmax.f32 %v492, 0.0
        %v497 = vmax.f32 %v493, 0.0
        %v498 = vmax.f32 %v494, 0.0
        %v499 = vpack.c.bf16 %v496, %v495
        %v500 = vpack.c.bf16 %v498, %v497
        %v501 = vld [vmem:[%s3] sm:$0xf]
        %v502 = vld [vmem:[%s3 + $0x4] sm:$0xf]
        %v503 = vld [vmem:[%s3 + $0x8] sm:$0xf]
        %v504 = vld [vmem:[%s3 + $0xc] sm:$0xf]
        %v505 = vld [vmem:[%s3 + $0x10] sm:$0xf]
        %v506 = vld [vmem:[%s3 + $0x14] sm:$0xf]
        %v507 = vld [vmem:[%s3 + $0x18] sm:$0xf]
        %v508 = vld [vmem:[%s3 + $0x1c] sm:$0xf]
        %v509 = vld [vmem:[%s3 + $0x20] sm:$0xf]
        %v510 = vld [vmem:[%s3 + $0x24] sm:$0xf]
        %v511 = vld [vmem:[%s3 + $0x28] sm:$0xf]
        %v512 = vld [vmem:[%s3 + $0x2c] sm:$0xf]
        %v513 = vld [vmem:[%s3 + $0x30] sm:$0xf]
        %v514 = vld [vmem:[%s3 + $0x34] sm:$0xf]
        %v515 = vld [vmem:[%s3 + $0x38] sm:$0xf]
        %v516 = vld [vmem:[%s3 + $0x3c] sm:$0xf]
        %v517 = vld [vmem:[%s4] sm:$0x1]
        %v519 = vlaneseq
        %v520 = vshrl.u32 %v519, 7
        %v521 = vsub.s32 0, %v520
        %v522 = vrot.slane %v517, %v521
        %v540 = vunpack.c.l.b16 %v501
        %v541 = vunpack.c.l.b16 %v502
        %v542 = vunpack.c.l.b16 %v503
        %v543 = vunpack.c.l.b16 %v504
        %v544 = vunpack.c.l.b16 %v505
        %v545 = vunpack.c.l.b16 %v506
        %v546 = vunpack.c.l.b16 %v507
        %v547 = vunpack.c.l.b16 %v508
        %v548 = vunpack.c.l.b16 %v509
        %v549 = vunpack.c.l.b16 %v510
        %v550 = vunpack.c.l.b16 %v511
        %v551 = vunpack.c.l.b16 %v512
        %v552 = vunpack.c.l.b16 %v513
        %v553 = vunpack.c.l.b16 %v514
        %v554 = vunpack.c.l.b16 %v515
        %v555 = vunpack.c.l.b16 %v516
        %v556 = vpack.c.b16 %v541, %v540
        %v557 = vpack.c.b16 %v543, %v542
        %v558 = vpack.c.b16 %v545, %v544
        %v559 = vpack.c.b16 %v547, %v546
        %v560 = vpack.c.b16 %v549, %v548
        %v561 = vpack.c.b16 %v551, %v550
        %v562 = vpack.c.b16 %v553, %v552
        %v563 = vpack.c.b16 %v555, %v554
        %572 = vmatprep.subr.bf16.mxu0 0
        %573 = vmatpush1.bf16.msra.mxu0 %v563
        %574 = vmatprep.subr.bf16.mxu0 0
        %575 = vmatpush1.bf16.msra.mxu0 %v562
        %576 = vmatprep.subr.bf16.mxu0 0
        %577 = vmatpush1.bf16.msra.mxu0 %v561
        %578 = vmatprep.subr.bf16.mxu0 0
        %579 = vmatpush1.bf16.msra.mxu0 %v560
        %580 = vmatprep.subr.bf16.mxu0 0
        %581 = vmatpush1.bf16.msra.mxu0 %v559
        %582 = vmatprep.subr.bf16.mxu0 0
        %583 = vmatpush1.bf16.msra.mxu0 %v558
        %584 = vmatprep.subr.bf16.mxu0 0
        %585 = vmatpush1.bf16.msra.mxu0 %v557
        %586 = vmatprep.subr.bf16.mxu0 0
        %587 = vmatpush1.bf16.msra.mxu0 %v556
        %588 = vmatprep.subr.bf16.mxu0 0
        %589 = vmatpush2.bf16.msra.mxu0 0
        %590 = vmatprep.subr.bf16.mxu0 0
        %591 = vmatpush2.bf16.msra.mxu0 0
        %592 = vmatprep.subr.bf16.mxu0 0
        %593 = vmatpush2.bf16.msra.mxu0 0
        %594 = vmatprep.subr.bf16.mxu0 0
        %595 = vmatpush2.bf16.msra.mxu0 0
        %596 = vmatprep.subr.bf16.mxu0 0
        %597 = vmatpush2.bf16.msra.mxu0 0
        %598 = vmatprep.subr.bf16.mxu0 0
        %599 = vmatpush2.bf16.msra.mxu0 0
        %600 = vmatprep.subr.bf16.mxu0 0
        %601 = vmatpush2.bf16.msra.mxu0 0
        %602 = vmatprep.subr.bf16.mxu0 0
        %603 = vmatpush2.bf16.msra.mxu0 0
        %604 = vmatprep.mubr.bf16.mxu0 0
        %605 = vmatmul.mubr.bf16.gmra.mxu0 %v499
        %v606 = vpop.f32.mrf.mxu0
        %v607 = vadd.f32 %v522, %v606
        %v608 = vpop.f32.mrf.mxu0
        %v609 = vpop.f32.mrf.mxu0
        %v610 = vadd.f32 %v522, %v609
        %v611 = vpop.f32.mrf.mxu0
        %612 = vmatprep.mubr.bf16.mxu0 0
        %613 = vmatmul.mubr.bf16.gmra.mxu0 %v500
        %v614 = vpop.f32.mrf.mxu0
        %v615 = vadd.f32 %v522, %v614
        %v616 = vpop.f32.mrf.mxu0
        %v617 = vpop.f32.mrf.mxu0
        %v618 = vadd.f32 %v522, %v617
        %v619 = vpop.f32.mrf.mxu0
        %620 = vdwg.mxu0
        %v621 = vmax.f32 %v607, 0.0
        %v622 = vmax.f32 %v610, 0.0
        %v623 = vmax.f32 %v615, 0.0
        %v624 = vmax.f32 %v618, 0.0
        %v625 = vpack.c.bf16 %v622, %v621
        %v626 = vpack.c.bf16 %v624, %v623
        %v627 = vld [vmem:[%s5] sm:$0xf]
        %v628 = vld [vmem:[%s5 + $0x4] sm:$0xf]
        %v629 = vld [vmem:[%s5 + $0x8] sm:$0xf]
        %v630 = vld [vmem:[%s5 + $0xc] sm:$0xf]
        %v631 = vld [vmem:[%s5 + $0x10] sm:$0xf]
        %v632 = vld [vmem:[%s5 + $0x14] sm:$0xf]
        %v633 = vld [vmem:[%s5 + $0x18] sm:$0xf]
        %v634 = vld [vmem:[%s5 + $0x1c] sm:$0xf]
        %v635 = vld [vmem:[%s5 + $0x20] sm:$0xf]
        %v636 = vld [vmem:[%s5 + $0x24] sm:$0xf]
        %v637 = vld [vmem:[%s5 + $0x28] sm:$0xf]
        %v638 = vld [vmem:[%s5 + $0x2c] sm:$0xf]
        %v639 = vld [vmem:[%s5 + $0x30] sm:$0xf]
        %v640 = vld [vmem:[%s5 + $0x34] sm:$0xf]
        %v641 = vld [vmem:[%s5 + $0x38] sm:$0xf]
        %v642 = vld [vmem:[%s5 + $0x3c] sm:$0xf]
        %v643 = vld [vmem:[%s6] sm:$0x1]
        %v645 = vlaneseq
        %v646 = vshrl.u32 %v645, 7
        %v647 = vsub.s32 0, %v646
        %v648 = vrot.slane %v643, %v647
        %v666 = vunpack.c.l.b16 %v627
        %v667 = vunpack.c.l.b16 %v628
        %v668 = vunpack.c.l.b16 %v629
        %v669 = vunpack.c.l.b16 %v630
        %v670 = vunpack.c.l.b16 %v631
        %v671 = vunpack.c.l.b16 %v632
        %v672 = vunpack.c.l.b16 %v633
        %v673 = vunpack.c.l.b16 %v634
        %v674 = vunpack.c.l.b16 %v635
        %v675 = vunpack.c.l.b16 %v636
        %v676 = vunpack.c.l.b16 %v637
        %v677 = vunpack.c.l.b16 %v638
        %v678 = vunpack.c.l.b16 %v639
        %v679 = vunpack.c.l.b16 %v640
        %v680 = vunpack.c.l.b16 %v641
        %v681 = vunpack.c.l.b16 %v642
        %v682 = vpack.c.b16 %v667, %v666
        %v683 = vpack.c.b16 %v669, %v668
        %v684 = vpack.c.b16 %v671, %v670
        %v685 = vpack.c.b16 %v673, %v672
        %v686 = vpack.c.b16 %v675, %v674
        %v687 = vpack.c.b16 %v677, %v676
        %v688 = vpack.c.b16 %v679, %v678
        %v689 = vpack.c.b16 %v681, %v680
        %698 = vmatprep.subr.bf16.mxu0 0
        %699 = vmatpush1.bf16.msra.mxu0 %v689
        %700 = vmatprep.subr.bf16.mxu0 0
        %701 = vmatpush1.bf16.msra.mxu0 %v688
        %702 = vmatprep.subr.bf16.mxu0 0
        %703 = vmatpush1.bf16.msra.mxu0 %v687
        %704 = vmatprep.subr.bf16.mxu0 0
        %705 = vmatpush1.bf16.msra.mxu0 %v686
        %706 = vmatprep.subr.bf16.mxu0 0
        %707 = vmatpush1.bf16.msra.mxu0 %v685
        %708 = vmatprep.subr.bf16.mxu0 0
        %709 = vmatpush1.bf16.msra.mxu0 %v684
        %710 = vmatprep.subr.bf16.mxu0 0
        %711 = vmatpush1.bf16.msra.mxu0 %v683
        %712 = vmatprep.subr.bf16.mxu0 0
        %713 = vmatpush1.bf16.msra.mxu0 %v682
        %714 = vmatprep.subr.bf16.mxu0 0
        %715 = vmatpush2.bf16.msra.mxu0 0
        %716 = vmatprep.subr.bf16.mxu0 0
        %717 = vmatpush2.bf16.msra.mxu0 0
        %718 = vmatprep.subr.bf16.mxu0 0
        %719 = vmatpush2.bf16.msra.mxu0 0
        %720 = vmatprep.subr.bf16.mxu0 0
        %721 = vmatpush2.bf16.msra.mxu0 0
        %722 = vmatprep.subr.bf16.mxu0 0
        %723 = vmatpush2.bf16.msra.mxu0 0
        %724 = vmatprep.subr.bf16.mxu0 0
        %725 = vmatpush2.bf16.msra.mxu0 0
        %726 = vmatprep.subr.bf16.mxu0 0
        %727 = vmatpush2.bf16.msra.mxu0 0
        %728 = vmatprep.subr.bf16.mxu0 0
        %729 = vmatpush2.bf16.msra.mxu0 0
        %730 = vmatprep.mubr.bf16.mxu0 0
        %731 = vmatmul.mubr.bf16.gmra.mxu0 %v625
        %v732 = vpop.f32.mrf.mxu0
        %v733 = vadd.f32 %v648, %v732
        %v734 = vpop.f32.mrf.mxu0
        %v735 = vpop.f32.mrf.mxu0
        %v736 = vadd.f32 %v648, %v735
        %v737 = vpop.f32.mrf.mxu0
        %738 = vmatprep.mubr.bf16.mxu0 0
        %739 = vmatmul.mubr.bf16.gmra.mxu0 %v626
        %v740 = vpop.f32.mrf.mxu0
        %v741 = vadd.f32 %v648, %v740
        %v742 = vpop.f32.mrf.mxu0
        %v743 = vpop.f32.mrf.mxu0
        %v744 = vadd.f32 %v648, %v743
        %v745 = vpop.f32.mrf.mxu0
        %746 = vdwg.mxu0
        %v747 = vmax.f32 %v733, 0.0
        %v748 = vmax.f32 %v736, 0.0
        %v749 = vmax.f32 %v741, 0.0
        %v750 = vmax.f32 %v744, 0.0
        %v751 = vpack.c.bf16 %v748, %v747
        %v752 = vpack.c.bf16 %v750, %v749
        %v755 = vunpack.c.l.b16 %v751
        %v756 = vunpack.c.h.b16 %v751
        %v757 = vunpack.c.l.b16 %v752
        %v758 = vunpack.c.h.b16 %v752
        %v759 = vpack.c.b16 %v755, %v755
        %v760 = vpack.c.b16 %v756, %v756
        %v761 = vpack.c.b16 %v757, %v757
        %v762 = vpack.c.b16 %v758, %v758
        %767 = vst [vmem:[%s325] sm:$0xf] %v759
        %768 = vst [vmem:[%s325 + $0x4] sm:$0xf] %v760
        %769 = vst [vmem:[%s325 + $0x8] sm:$0xf] %v761
        %770 = vst [vmem:[%s325 + $0xc] sm:$0xf] %v762
      $region56: #{mlpconv_forward.1} parent=47 // pred_fallthru
        _
      %s771 = smul.u32 4, %s22
      %p772 = scmp.lt.s32.totalorder %s771, 7
      %s773 = scalar_select %p772, %s771, 7
      %s774 = smul.addr %s773, 4
      %s775 = scalar_lea.vmem %s7, %s774
      // Predicated region
      $region57: #{mlpconv_forward.1} parent=47 // pred_check
        %p776 = pneg %p207
      $region58: #{mlpconv_forward.1} parent=47 // pred_check_branch
        %778 = sbr.rel (%p776) target = $region60
      $region59: #{mlpconv_forward.1} parent=47 // pred_region
        %s779 = smul.u32 4, %s22
      $region60: #{mlpconv_forward.1} parent=47 // pred_fallthru
        _
    $region48: #{mlpconv_forward.1} parent=5 // pred_fallthru
      _
    %p780 = scmp.le.s32.totalorder 2, %s13
    // Predicated region
    $region61: #{mlpconv_forward.1} parent=5 // pred_check
      %p781 = pneg %p780
    $region62: #{mlpconv_forward.1} parent=5 // pred_check_branch
      %783 = sbr.rel (%p781) target = $region64
    $region63: #{mlpconv_forward.1} parent=5 // pred_region
      %s784 = ssub.s32 %s13, 2
      // Predicated region
      $region65: #{mlpconv_forward.1} parent=63 // pred_check
        %p785 = pneg %p213
      $region66: #{mlpconv_forward.1} parent=63 // pred_check_branch
        %787 = sbr.rel (%p785) target = $region68
      $region67: #{mlpconv_forward.1} parent=63 // pred_region
        %s788 = smul.u32 4, %s24
        %p789 = scmp.lt.s32.totalorder %s788, 7
        %s790 = scalar_select %p789, %s788, 7
        %s791 = smul.addr %s790, 4
        %s792 = scalar_lea.vmem %s7, %s791
      $region68: #{mlpconv_forward.1} parent=63 // pred_fallthru
        _
    $region64: #{mlpconv_forward.1} parent=5 // pred_fallthru
      _
  $region6: #{mlpconv_forward.1} parent=0 // loop_footer
    %s17 = sadd.s32 1, %s13
  $region7: #{mlpconv_forward.1} parent=0 // loop_footer_branch
    %12 = sbr.rel target = $region3
  $region8: #{mlpconv_forward.1} parent=0 // loop_exit
    _

</llo_original>
